<compile_context>
chip_gen: v5e
topology: v5e:2x2
jax: 0.10.0
libtpu: 0.0.40
codegen_flags: <defaults>
</compile_context>

<pallas_src>
import functools

import jax
import jax.numpy as jnp
from jax import lax
from jax.experimental import pallas as pl
from jax.experimental.pallas import tpu as pltpu


def _gdn_kernel(x_ref, gamma_ref, beta_ref, o_ref, *, inverse, small_c, bf16_mxu):
    # x_ref:     (C, T)  channel-major tile of one image's pixels (lanes = pixels)
    # gamma_ref: (C, C)  effective 1x1 conv weight (out_ch, in_ch)
    # beta_ref:  (C, 1)
    #
    # Ragged-edge invariant: the last HW tile may hold unspecified data in its
    # out-of-bounds tail LANES.  Every op below is either elementwise over
    # lanes or contracts over CHANNELS (sublanes), never across lanes, so
    # garbage lanes cannot contaminate valid lanes (possible NaN/Inf lives only
    # in masked lanes and is dropped by the masked boundary store).  Do NOT add
    # any lane-axis reduction / roll / shift here.
    x = x_ref[...].astype(jnp.float32)
    x2 = x * x

    if small_c:
        # Small C: unrolled VPU broadcast-FMA.  The MXU contraction would pad
        # K and M up to 128/256 and waste >= (128/C)^2 of the array while
        # adding push/pop latency to a tiny per-tile pipeline.
        g = gamma_ref[...].astype(jnp.float32)
        norm = beta_ref[...].astype(jnp.float32)            # (C, 1) -> broadcasts
        for ci in range(x2.shape[0]):
            norm = norm + g[:, ci:ci + 1] * x2[ci:ci + 1, :]
    else:
        a = gamma_ref[...]
        b = x2
        if bf16_mxu:
            # Large C: f32 MXU push can become the binding unit (v5e, and v7x
            # where HBM is 3.2 TB/s); bf16 operands + f32 accumulation keep the
            # kernel mem-bound.  Tolerance ~1e-3 relative in this regime.
            a = a.astype(jnp.bfloat16)
            b = b.astype(jnp.bfloat16)
        norm = jnp.dot(a, b, preferred_element_type=jnp.float32)
        norm = norm + beta_ref[...]

    if inverse:
        y = x * jnp.sqrt(norm)
    else:
        y = x * lax.rsqrt(norm)                              # EUP rsqrt, no divide
    o_ref[...] = y.astype(o_ref.dtype)


def gdn_params(num_channels, gamma_init=0.1, reparam_offset=2.0 ** (-18)):
    """Deterministic parameter init matching GDN.reset_parameters()."""
    pedestal = reparam_offset ** 2
    nc = num_channels
    beta_raw = jnp.sqrt(jnp.ones((1, nc), jnp.float32) + pedestal)
    gamma_raw = jnp.sqrt(gamma_init * jnp.eye(nc, dtype=jnp.float32) + pedestal)
    return gamma_raw, beta_raw


def _pick_tile_hw(hw, c, n, *, target_bytes=2 << 20, min_parallel=4):
    """Lane tile for the (C, tile) block.

    ~target_bytes of f32 per block (i.e. tile scales with 1/C), 128-aligned,
    then shrunk (still 128-aligned) until the grid exposes >= min_parallel
    parallel steps so both v7x TensorCores get work.
    """
    if hw < 128:
        return hw                                   # full-extent block (always legal)
    t = (target_bytes // (4 * c)) // 128 * 128      # scale inversely with C
    t = max(512, min(t, 8192))
    t = min(t, pl.cdiv(hw, 128) * 128)              # no point exceeding the array
    while t > 128 and n * pl.cdiv(hw, t) < min_parallel:
        t = max(128, (t // 2) // 128 * 128)
    return t


def gdn_forward(x_nchw, gamma_raw, beta_raw, *, inverse=False,
                beta_min=1e-6, reparam_offset=2.0 ** (-18), tile_hw=None):
    """GDN forward.  x_nchw: (N, C, H, W)."""
    N, C, H, W = x_nchw.shape
    pedestal = reparam_offset ** 2
    beta_bound = (beta_min + pedestal) ** 0.5
    gamma_bound = reparam_offset

    # Reparametrization (tiny elementwise op on (C,C)/(1,C) — plain JAX glue).
    gamma = jnp.square(jnp.maximum(gamma_raw, gamma_bound)) - pedestal        # (C, C)
    # beta > 0 after the clamp (beta_bound = sqrt(beta_min + pedestal) > 0),
    # so rsqrt(norm) is finite on every valid lane.
    beta = (jnp.square(jnp.maximum(beta_raw, beta_bound)) - pedestal).reshape(C, 1)

    HW = H * W
    x = x_nchw.reshape(N, C, HW)       # free reshape — no transpose / pad / slice

    if tile_hw is None:
        tile_hw = _pick_tile_hw(HW, C, N)
    # Ragged HW: cdiv grid, Pallas masks the partial boundary tile.  No HBM
    # round-trips for pad/slice outside the kernel.
    grid = (N, pl.cdiv(HW, tile_hw))

    itemsize = jnp.dtype(x_nchw.dtype).itemsize
    cost = pl.CostEstimate(
        flops=int(2 * N * HW * C * C),
        transcendentals=int(N * C * HW),
        bytes_accessed=int(2 * N * C * HW * itemsize + C * C * 4 + C * 4),
    )

    small_c = C <= 32
    bf16_mxu = (not small_c) and C >= 256

    kernel = functools.partial(_gdn_kernel, inverse=inverse,
                               small_c=small_c, bf16_mxu=bf16_mxu)
    out = pl.pallas_call(
        kernel,
        out_shape=jax.ShapeDtypeStruct((N, C, HW), x_nchw.dtype),
        grid_spec=pltpu.PrefetchScalarGridSpec(
            num_scalar_prefetch=0,
            grid=grid,
            in_specs=[
                pl.BlockSpec((None, C, tile_hw), lambda n, j: (n, 0, j)),
                pl.BlockSpec((C, C), lambda n, j: (0, 0)),
                pl.BlockSpec((C, 1), lambda n, j: (0, 0)),
            ],
            out_specs=pl.BlockSpec((None, C, tile_hw), lambda n, j: (n, 0, j)),
        ),
        compiler_params=pltpu.CompilerParams(
            dimension_semantics=("parallel", "parallel"),
            # Double-buffered working set stays <= ~10 MiB with the byte-sized
            # tile, leaving headroom on v7x's 64 MiB VMEM as well.
            vmem_limit_bytes=32 * 1024 * 1024),
        cost_estimate=cost,
    )(x, gamma, beta)

    return out.reshape(N, C, H, W)


def _gdn_reference(x_nchw, gamma_raw, beta_raw, *, inverse=False,
                   beta_min=1e-6, reparam_offset=2.0 ** (-18)):
    """Pure-JAX reference matching the PyTorch forward."""
    pedestal = reparam_offset ** 2
    beta_bound = (beta_min + pedestal) ** 0.5
    gamma_bound = reparam_offset
    gamma = jnp.square(jnp.maximum(gamma_raw, gamma_bound)) - pedestal
    beta = jnp.square(jnp.maximum(beta_raw, beta_bound)) - pedestal
    x2 = x_nchw * x_nchw
    norm = jnp.einsum('ncyx,oc->noyx', x2, gamma,
                      precision=lax.Precision.HIGHEST) + beta.reshape(1, -1, 1, 1)
    norm = jnp.sqrt(norm)
    return x_nchw * norm if inverse else x_nchw / norm


if __name__ == "__main__":
    key = jax.random.PRNGKey(0)
    N, C, H, W = 2, 4, 16, 16
    x = jax.random.normal(key, (N, C, H, W), dtype=jnp.float32)

    gamma_raw, beta_raw = gdn_params(C)

    # Forward (normal) path.
    out = gdn_forward(x, gamma_raw, beta_raw, inverse=False)
    out = jax.block_until_ready(out)
    ref = _gdn_reference(x, gamma_raw, beta_raw, inverse=False)
    assert out.shape == (N, C, H, W)
    assert jnp.allclose(out, ref, atol=1e-5, rtol=1e-5), "mismatch vs reference"

    # Inverse (IGDN) path.
    out_inv = jax.block_until_ready(gdn_forward(x, gamma_raw, beta_raw, inverse=True))
    ref_inv = _gdn_reference(x, gamma_raw, beta_raw, inverse=True)
    assert jnp.allclose(out_inv, ref_inv, atol=1e-5, rtol=1e-5), "inverse mismatch"

    # Ragged H*W (not a multiple of 128) exercises the masked boundary tile
    # with no XLA-side pad/slice.
    x2_in = jax.random.normal(jax.random.PRNGKey(1), (2, 4, 15, 9), dtype=jnp.float32)
    out_r = jax.block_until_ready(gdn_forward(x2_in, gamma_raw, beta_raw))
    ref_r = _gdn_reference(x2_in, gamma_raw, beta_raw)
    assert jnp.allclose(out_r, ref_r, atol=1e-5, rtol=1e-5), "ragged mismatch"

    print("KERNEL_OK")
</pallas_src>

<mosaic_0001>
module attributes {stable_mosaic.version = 11 : i64} {
  func.func @_gdn_kernel(%arg0: i32, %arg1: i32, %arg2: memref<1x4x128xf32, #tpu.memory_space<vmem>>, %arg3: memref<4x4xf32, #tpu.memory_space<vmem>>, %arg4: memref<4x1xf32, #tpu.memory_space<vmem>>, %arg5: memref<1x4x128xf32, #tpu.memory_space<vmem>>) attributes {dimension_semantics = [#tpu.dimension_semantics<parallel>, #tpu.dimension_semantics<parallel>], iteration_bounds = array<i64: 2, 2>, scalar_prefetch = 0 : i64, scratch_operands = 0 : i64, tpu.core_type = #tpu.core_type<tc>, window_params = [{transform_indices = @transform_0, window_bounds = array<i64: 1, 4, 128>}, {pipeline_mode = #tpu.pipeline_mode<synchronous>, transform_indices = @transform_1, window_bounds = array<i64: 4, 4>}, {pipeline_mode = #tpu.pipeline_mode<synchronous>, transform_indices = @transform_2, window_bounds = array<i64: 4, 1>}, {transform_indices = @transform_3, window_bounds = array<i64: 1, 4, 128>}]} {
    %c0 = arith.constant 0 : index
    %c0_0 = arith.constant 0 : index
    %c0_1 = arith.constant 0 : index
    %0 = vector.load %arg2[%c0, %c0_0, %c0_1] : memref<1x4x128xf32, #tpu.memory_space<vmem>>, vector<1x4x128xf32>
    %1 = vector.shape_cast %0 : vector<1x4x128xf32> to vector<4x128xf32>
    %2 = arith.mulf %1, %1 : vector<4x128xf32>
    %c0_2 = arith.constant 0 : index
    %c0_3 = arith.constant 0 : index
    %3 = vector.load %arg3[%c0_2, %c0_3] : memref<4x4xf32, #tpu.memory_space<vmem>>, vector<4x4xf32>
    %c0_4 = arith.constant 0 : index
    %c0_5 = arith.constant 0 : index
    %4 = vector.load %arg4[%c0_4, %c0_5] : memref<4x1xf32, #tpu.memory_space<vmem>>, vector<4x1xf32>
    %5 = vector.extract_strided_slice %3 {offsets = [0, 0], sizes = [4, 1], strides = [1, 1]} : vector<4x4xf32> to vector<4x1xf32>
    %6 = vector.extract_strided_slice %2 {offsets = [0, 0], sizes = [1, 128], strides = [1, 1]} : vector<4x128xf32> to vector<1x128xf32>
    %7 = vector.broadcast %5 : vector<4x1xf32> to vector<4x128xf32>
    %8 = vector.broadcast %6 : vector<1x128xf32> to vector<4x128xf32>
    %9 = arith.mulf %7, %8 : vector<4x128xf32>
    %10 = vector.broadcast %4 : vector<4x1xf32> to vector<4x128xf32>
    %11 = arith.addf %10, %9 : vector<4x128xf32>
    %12 = vector.extract_strided_slice %3 {offsets = [0, 1], sizes = [4, 1], strides = [1, 1]} : vector<4x4xf32> to vector<4x1xf32>
    %13 = vector.extract_strided_slice %2 {offsets = [1, 0], sizes = [1, 128], strides = [1, 1]} : vector<4x128xf32> to vector<1x128xf32>
    %14 = vector.broadcast %12 : vector<4x1xf32> to vector<4x128xf32>
    %15 = vector.broadcast %13 : vector<1x128xf32> to vector<4x128xf32>
    %16 = arith.mulf %14, %15 : vector<4x128xf32>
    %17 = arith.addf %11, %16 : vector<4x128xf32>
    %18 = vector.extract_strided_slice %3 {offsets = [0, 2], sizes = [4, 1], strides = [1, 1]} : vector<4x4xf32> to vector<4x1xf32>
    %19 = vector.extract_strided_slice %2 {offsets = [2, 0], sizes = [1, 128], strides = [1, 1]} : vector<4x128xf32> to vector<1x128xf32>
    %20 = vector.broadcast %18 : vector<4x1xf32> to vector<4x128xf32>
    %21 = vector.broadcast %19 : vector<1x128xf32> to vector<4x128xf32>
    %22 = arith.mulf %20, %21 : vector<4x128xf32>
    %23 = arith.addf %17, %22 : vector<4x128xf32>
    %24 = vector.extract_strided_slice %3 {offsets = [0, 3], sizes = [4, 1], strides = [1, 1]} : vector<4x4xf32> to vector<4x1xf32>
    %25 = vector.extract_strided_slice %2 {offsets = [3, 0], sizes = [1, 128], strides = [1, 1]} : vector<4x128xf32> to vector<1x128xf32>
    %26 = vector.broadcast %24 : vector<4x1xf32> to vector<4x128xf32>
    %27 = vector.broadcast %25 : vector<1x128xf32> to vector<4x128xf32>
    %28 = arith.mulf %26, %27 : vector<4x128xf32>
    %29 = arith.addf %23, %28 : vector<4x128xf32>
    %30 = math.rsqrt %29 : vector<4x128xf32>
    %31 = arith.mulf %1, %30 : vector<4x128xf32>
    %c0_6 = arith.constant 0 : index
    %c0_7 = arith.constant 0 : index
    %c0_8 = arith.constant 0 : index
    %32 = vector.load %arg5[%c0_6, %c0_7, %c0_8] : memref<1x4x128xf32, #tpu.memory_space<vmem>>, vector<1x4x128xf32>
    %33 = vector.shape_cast %32 : vector<1x4x128xf32> to vector<4x128xf32>
    %34 = vector.shape_cast %31 : vector<4x128xf32> to vector<1x4x128xf32>
    tpu.vector_store %arg5[%c0_6, %c0_7, %c0_8], %34 {strides = array<i32>} : memref<1x4x128xf32, #tpu.memory_space<vmem>>, vector<1x4x128xf32>,
    return
  }
  func.func @transform_0(%arg0: i32, %arg1: i32) -> (i32, i32, i32) {
    %c0_i32 = arith.constant 0 : i32
    %c0_i32_0 = arith.constant 0 : i32
    return %arg0, %c0_i32, %arg1 : i32, i32, i32
  }
  func.func @transform_1(%arg0: i32, %arg1: i32) -> (i32, i32) {
    %c0_i32 = arith.constant 0 : i32
    %c0_i32_0 = arith.constant 0 : i32
    %c0_i32_1 = arith.constant 0 : i32
    return %c0_i32, %c0_i32_0 : i32, i32
  }
  func.func @transform_2(%arg0: i32, %arg1: i32) -> (i32, i32) {
    %c0_i32 = arith.constant 0 : i32
    %c0_i32_0 = arith.constant 0 : i32
    %c0_i32_1 = arith.constant 0 : i32
    return %c0_i32, %c0_i32_0 : i32, i32
  }
  func.func @transform_3(%arg0: i32, %arg1: i32) -> (i32, i32, i32) {
    %c0_i32 = arith.constant 0 : i32
    %c0_i32_0 = arith.constant 0 : i32
    return %arg0, %c0_i32, %arg1 : i32, i32, i32
  }
}

</mosaic_0001>

<llo_original>
// kernel: tpu_custom_call.1
$region0: #{tpu_custom_call.1}
  #allocation0 [shape = 'u32[]', space=smem, size = 0x4, offset = 0x4, fixed_abs, tag = 'smem constant byte address 0x4 - core index']
  #allocation1 [shape = 'u32[72,128]{1,0:T(1,128)}', space=vmem, size = 0x9000, scoped, tag = 'internal scratch']
  %s0 = inlined_call_operand.hbm [shape: f32[2,4,256], index: 0, kind: input, shape index: {}]
  %s1 = inlined_call_operand.vmem [shape: f32[4,4], index: 1, kind: input, shape index: {}]
  %s2 = inlined_call_operand.vmem [shape: f32[4,1], index: 2, kind: input, shape index: {}]
  %s3 = inlined_call_operand.hbm [shape: f32[2,4,256], index: 3, kind: output, shape index: {}]
  %s4 = sld [smem:[#allocation0]]
  $region49: #{tpu_custom_call.1} parent=0
    _
  %s6 = ssub.s32 1, %s4
  %s7 = scalar_select 0, %s6, %s4
  $region1: #{tpu_custom_call.1} parent=0
    #allocation2 [shape = 'u8[4096]{0}', space=vmem, size = 0x1000, scoped, tag = 'input window, operand 0']
    #allocation3 [shape = 's32[2]{0}', space=sflag, size = 0x8, scoped, tag = 'scoped memory for tpu_custom_call.1']
    #allocation4 [shape = 's32[2]{0}', space=sflag, size = 0x8, scoped, tag = 'scoped memory for tpu_custom_call.1']
    #allocation5 [shape = 'u8[4096]{0}', space=vmem, size = 0x1000, scoped, tag = 'output window, operand 0']
    %8 = vsyncpa [#allocation3], 0
    %s9 = scalar_lea.sflag [#allocation3], 1
    %10 = vsyncpa %s9, 0
    %11 = vsyncpa [#allocation4], 0
    %s12 = scalar_lea.sflag [#allocation4], 1
    %13 = vsyncpa %s12, 0
    loop: start=0, step=1, limit=6
    $region2: #{tpu_custom_call.1} parent=1 // loop_pre_header
      _
    $region3: #{tpu_custom_call.1} parent=1 // loop_header
      %s15 = sphi 0, %s19
      %p16 = scmp.ge.s32.totalorder %s15, 6
      %s22 = sphi 0, %s34
      %s23 = sphi 0, %s30
      %s24 = sphi 0, %s22
      %s25 = sphi 0, %s23
      %s26 = sphi 0, %s24
      %s27 = sphi 0, %s25
      %s39 = sphi 0, %s41
      %s42 = sphi 0, %s39
      %s43 = sphi 0, %s42
      %s59 = sphi 0, %s43
      %s63 = sphi 0, %s63
      %s65 = sphi 0, %s63
      %s66 = sphi 0, %s65
      %s80 = sphi 0, %s66
      %s84 = sphi 0, %s84
      %s86 = sphi 0, %s84
      %s87 = sphi 0, %s86
      %s101 = sphi 0, %s87
      %s109 = sphi 0, %s111
      %s112 = sphi 0, %s109
      %s113 = sphi 0, %s112
      %s129 = sphi 0, %s113
    $region4: #{tpu_custom_call.1} parent=1 // loop_header_branch
      %18 = sbr.rel (%p16) target = $region8
    $region5: #{tpu_custom_call.1} parent=1 // loop_body
      %s20 = ssub.s32 %s15, 1
      %s21 = ssub.s32 %s15, 2
      %s28 = sadd.s32 1, %s23
      %p29 = scmp.ge.s32.totalorder %s28, 2
      %s30 = scalar_select %p29, 0, %s28
      %s31 = sadd.s32 1, %s22
      %s32 = scalar_select %p29, %s31, %s22
      %p33 = scmp.ge.s32.totalorder %s32, 2
      %s34 = scalar_select %p33, 0, %s32
      %s35 = ssub.s32 %s22, %s34
      %s36 = ssub.s32 %s23, %s30
      %s37 = sor.u32 %s35, %s36
      %p38 = scmp.eq.s32.totalorder %s37, 0
      %s40 = sadd.s32 %s39, 1
      %s41 = scalar_select %p38, %s39, %s40
      %p44 = pneg %p38
      %p45 = scmp.eq.s32.totalorder %s15, 3
      %p46 = por %p44, %p45
      %p47 = scmp.ne.s32.totalorder %s39, %s42
      %p48 = scmp.eq.s32.totalorder %s15, 0
      %p49 = por %p47, %p48
      %p50 = scmp.ne.s32.totalorder %s39, %s42
      %p51 = scmp.eq.s32.totalorder %s20, 3
      %p52 = por %p50, %p51
      %p53 = scmp.ne.s32.totalorder %s42, %s43
      %p54 = scmp.eq.s32.totalorder %s20, 0
      %p55 = por %p53, %p54
      %p56 = scmp.ne.s32.totalorder %s42, %s43
      %p57 = scmp.eq.s32.totalorder %s21, 3
      %p58 = por %p56, %p57
      %p60 = scmp.ne.s32.totalorder %s43, %s59
      %p61 = scmp.eq.s32.totalorder %s21, 0
      %p62 = por %p60, %p61
      %s64 = sadd.s32 %s63, 1
      %p67 = scmp.eq.s32.totalorder %s15, 3
      %p68 = scmp.ne.s32.totalorder %s63, %s65
      %p69 = scmp.eq.s32.totalorder %s15, 0
      %p70 = por %p68, %p69
      %p71 = scmp.ne.s32.totalorder %s63, %s65
      %p72 = scmp.eq.s32.totalorder %s20, 3
      %p73 = por %p71, %p72
      %p74 = scmp.ne.s32.totalorder %s65, %s66
      %p75 = scmp.eq.s32.totalorder %s20, 0
      %p76 = por %p74, %p75
      %p77 = scmp.ne.s32.totalorder %s65, %s66
      %p78 = scmp.eq.s32.totalorder %s21, 3
      %p79 = por %p77, %p78
      %p81 = scmp.ne.s32.totalorder %s66, %s80
      %p82 = scmp.eq.s32.totalorder %s21, 0
      %p83 = por %p81, %p82
      %s85 = sadd.s32 %s84, 1
      %p88 = scmp.eq.s32.totalorder %s15, 3
      %p89 = scmp.ne.s32.totalorder %s84, %s86
      %p90 = scmp.eq.s32.totalorder %s15, 0
      %p91 = por %p89, %p90
      %p92 = scmp.ne.s32.totalorder %s84, %s86
      %p93 = scmp.eq.s32.totalorder %s20, 3
      %p94 = por %p92, %p93
      %p95 = scmp.ne.s32.totalorder %s86, %s87
      %p96 = scmp.eq.s32.totalorder %s20, 0
      %p97 = por %p95, %p96
      %p98 = scmp.ne.s32.totalorder %s86, %s87
      %p99 = scmp.eq.s32.totalorder %s21, 3
      %p100 = por %p98, %p99
      %p102 = scmp.ne.s32.totalorder %s87, %s101
      %p103 = scmp.eq.s32.totalorder %s21, 0
      %p104 = por %p102, %p103
      %s105 = ssub.s32 %s22, %s34
      %s106 = ssub.s32 %s23, %s30
      %s107 = sor.u32 %s105, %s106
      %p108 = scmp.eq.s32.totalorder %s107, 0
      %s110 = sadd.s32 %s109, 1
      %s111 = scalar_select %p108, %s109, %s110
      %p114 = pneg %p108
      %p115 = scmp.eq.s32.totalorder %s15, 3
      %p116 = por %p114, %p115
      %p117 = scmp.ne.s32.totalorder %s109, %s112
      %p118 = scmp.eq.s32.totalorder %s15, 0
      %p119 = por %p117, %p118
      %p120 = scmp.ne.s32.totalorder %s109, %s112
      %p121 = scmp.eq.s32.totalorder %s20, 3
      %p122 = por %p120, %p121
      %p123 = scmp.ne.s32.totalorder %s112, %s113
      %p124 = scmp.eq.s32.totalorder %s20, 0
      %p125 = por %p123, %p124
      %p126 = scmp.ne.s32.totalorder %s112, %s113
      %p127 = scmp.eq.s32.totalorder %s21, 3
      %p128 = por %p126, %p127
      %p130 = scmp.ne.s32.totalorder %s113, %s129
      %p131 = scmp.eq.s32.totalorder %s21, 0
      %p132 = por %p130, %p131
      %p133 = scmp.le.s32.totalorder 1, %s15
      %p134 = scmp.lt.s32.totalorder %s15, 5
      %p135 = pnand %p133, %p134
      %p136 = pneg %p135
      // Predicated region
      $region9: #{tpu_custom_call.1} parent=5 // pred_check
        _
      $region10: #{tpu_custom_call.1} parent=5 // pred_check_branch
        %138 = sbr.rel (%p135) target = $region12
      $region11: #{tpu_custom_call.1} parent=5 // pred_region
        %s139 = ssub.s32 %s15, 1
        // Predicated region
        $region13: #{tpu_custom_call.1} parent=11 // pred_check
          %p140 = pneg %p76
        $region14: #{tpu_custom_call.1} parent=11 // pred_check_branch
          %142 = sbr.rel (%p140) target = $region16
        $region15: #{tpu_custom_call.1} parent=11 // pred_region
          _
        $region16: #{tpu_custom_call.1} parent=11 // pred_fallthru
          _
        // Predicated region
        $region17: #{tpu_custom_call.1} parent=11 // pred_check
          %p143 = pneg %p97
        $region18: #{tpu_custom_call.1} parent=11 // pred_check_branch
          %145 = sbr.rel (%p143) target = $region20
        $region19: #{tpu_custom_call.1} parent=11 // pred_region
          _
        $region20: #{tpu_custom_call.1} parent=11 // pred_fallthru
          _
      $region12: #{tpu_custom_call.1} parent=5 // pred_fallthru
        _
      %p146 = scmp.lt.s32.totalorder %s15, 4
      // Predicated region
      $region21: #{tpu_custom_call.1} parent=5 // pred_check
        %p147 = pneg %p146
      $region22: #{tpu_custom_call.1} parent=5 // pred_check_branch
        %149 = sbr.rel (%p147) target = $region24
      $region23: #{tpu_custom_call.1} parent=5 // pred_region
        // Predicated region
        $region25: #{tpu_custom_call.1} parent=23 // pred_check
          %p150 = pneg %p49
        $region26: #{tpu_custom_call.1} parent=23 // pred_check_branch
          %152 = sbr.rel (%p150) target = $region28
        $region27: #{tpu_custom_call.1} parent=23 // pred_region
          %s153 = sand.u32 %s39, 1
          %s154 = scalar_lea.sflag [#allocation3], %s153
          %s155 = sand.u32 %s39, 1
          %s156 = smul.addr %s155, 4
          %s157 = scalar_lea.vmem [#allocation2], %s156
          %159 = vsyncadd %s154, 0
          %s160 = smul.addr %s22, 2
          %s161 = sadd.s32 %s23, %s160
          %s162 = smul.addr %s161, 4
          %s163 = scalar_lea.hbm %s0, %s162
          %s165 = sshll.u32 %s163, 4
          %s166 = int_to_ptr.hbm [resolvable:$true] %s165
          %s167 = sshll.u32 %s157, 4
          %s168 = int_to_ptr.vmem [resolvable:$true] %s167
          %170 = dma.hbm_to_vmem [thread:$0]  %s166, 64, %s168, %s154
        $region28: #{tpu_custom_call.1} parent=23 // pred_fallthru
          _
      $region24: #{tpu_custom_call.1} parent=5 // pred_fallthru
        _
      %p171 = scmp.le.s32.totalorder 1, %s15
      %p172 = scmp.lt.s32.totalorder %s15, 5
      %p173 = pnand %p171, %p172
      %p174 = pneg %p173
      // Predicated region
      $region29: #{tpu_custom_call.1} parent=5 // pred_check
        _
      $region30: #{tpu_custom_call.1} parent=5 // pred_check_branch
        %176 = sbr.rel (%p173) target = $region32
      $region31: #{tpu_custom_call.1} parent=5 // pred_region
        %s177 = ssub.s32 %s15, 1
        %s178 = sand.u32 %s42, 1
        %s179 = scalar_lea.sflag [#allocation3], %s178
        %s180 = sand.u32 %s42, 1
        %s181 = smul.addr %s180, 4
        %s182 = scalar_lea.vmem [#allocation2], %s181
        // Predicated region
        $region33: #{tpu_custom_call.1} parent=31 // pred_check
          %p183 = pneg %p55
        $region34: #{tpu_custom_call.1} parent=31 // pred_check_branch
          %185 = sbr.rel (%p183) target = $region36
        $region35: #{tpu_custom_call.1} parent=31 // pred_region
          %187 = dma.done %s179, 64
        $region36: #{tpu_custom_call.1} parent=31 // pred_fallthru
          _
        %s188 = sand.u32 %s42, 1
        %s189 = scalar_lea.sflag [#allocation3], %s188
        %s190 = sand.u32 %s42, 1
        %s191 = smul.addr %s190, 4
        %s192 = scalar_lea.vmem [#allocation2], %s191
        %p193 = pneg %p55
        %p194 = pneg %p52
        %p195 = pneg %p76
        %p196 = pneg %p73
        %p197 = pneg %p97
        %p198 = pneg %p94
        %p199 = pneg %p125
        %p200 = pneg %p122
        %s201 = sand.u32 %s112, 1
        %s202 = scalar_lea.sflag [#allocation4], %s201
        %s203 = sand.u32 %s112, 1
        %s204 = smul.addr %s203, 4
        %s205 = scalar_lea.vmem [#allocation5], %s204
        %v206 = vld [vmem:[%s182] sm:$0xf]
        %v207 = vmul.f32 %v206, %v206
        %v208 = vld [vmem:[%s1] sm:$0xf]
        %v209 = vld [vmem:[%s2] sm:$0xf]
        %211 = vset.pattern.permute.xlu0 0
        %212 = vperm.xlu0 %211, %v208
        %v213 = vpop.permute.xlu0 %212
        %v215 = vperm.slane %v207, 0
        %v216 = vmul.f32 %v213, %v215
        %218 = vset.pattern.permute.xlu0 0
        %219 = vperm.xlu0 %218, %v209
        %v220 = vpop.permute.xlu0 %219
        %v222 = vadd.f32 %v220, %v216
        %223 = vset.pattern.permute.xlu0 1
        %224 = vperm.xlu0 %223, %v208
        %v225 = vpop.permute.xlu0 %224
        %v227 = vperm.slane %v207, 1
        %v228 = vmul.f32 %v225, %v227
        %v229 = vadd.f32 %v222, %v228
        %230 = vset.pattern.permute.xlu0 2
        %231 = vperm.xlu0 %230, %v208
        %v232 = vpop.permute.xlu0 %231
        %v234 = vperm.slane %v207, 2
        %v235 = vmul.f32 %v232, %v234
        %v236 = vadd.f32 %v229, %v235
        %237 = vset.pattern.permute.xlu0 3
        %238 = vperm.xlu0 %237, %v208
        %v239 = vpop.permute.xlu0 %238
        %v241 = vperm.slane %v207, 3
        %v242 = vmul.f32 %v239, %v241
        %v243 = vadd.f32 %v236, %v242
        %v244 = vrsqrt.pop %v243
        %v245 = vmul.f32 %v244, %v243
        %v246 = vmul.f32 %v245, %v244
        %v247 = vmul.f32 0.5, %v246
        %v248 = vsub.f32 1.5, %v247
        %v249 = vmul.f32 %v244, %v248
        %vm250 = vweird.f32 %v243
        %vm251 = vweird.f32 %v244
        %vm252 = vmor %vm250, %vm251
        %v253 = vsel %vm252, %v244, %v249
        %v254 = vmul.f32 %v206, %v253
        %255 = vst [vmem:[%s205] sm:$0xf] %v254
        %s256 = sand.u32 %s112, 1
        %s257 = scalar_lea.sflag [#allocation4], %s256
        %s258 = sand.u32 %s112, 1
        %s259 = smul.addr %s258, 4
        %s260 = scalar_lea.vmem [#allocation5], %s259
        // Predicated region
        $region37: #{tpu_custom_call.1} parent=31 // pred_check
          %p261 = pneg %p122
        $region38: #{tpu_custom_call.1} parent=31 // pred_check_branch
          %263 = sbr.rel (%p261) target = $region40
        $region39: #{tpu_custom_call.1} parent=31 // pred_region
          %265 = vsyncadd %s257, 0
          %s266 = smul.addr %s24, 2
          %s267 = sadd.s32 %s25, %s266
          %s268 = smul.addr %s267, 4
          %s269 = scalar_lea.hbm %s3, %s268
          %s271 = sshll.u32 %s260, 4
          %s272 = int_to_ptr.vmem [resolvable:$true] %s271
          %s273 = sshll.u32 %s269, 4
          %s274 = int_to_ptr.hbm [resolvable:$true] %s273
          %276 = dma.vmem_to_hbm [thread:$0]  %s272, 64, %s274, %s257
        $region40: #{tpu_custom_call.1} parent=31 // pred_fallthru
          _
      $region32: #{tpu_custom_call.1} parent=5 // pred_fallthru
        _
      %p277 = scmp.le.s32.totalorder 2, %s15
      // Predicated region
      $region41: #{tpu_custom_call.1} parent=5 // pred_check
        %p278 = pneg %p277
      $region42: #{tpu_custom_call.1} parent=5 // pred_check_branch
        %280 = sbr.rel (%p278) target = $region44
      $region43: #{tpu_custom_call.1} parent=5 // pred_region
        %s281 = ssub.s32 %s15, 2
        // Predicated region
        $region45: #{tpu_custom_call.1} parent=43 // pred_check
          %p282 = pneg %p128
        $region46: #{tpu_custom_call.1} parent=43 // pred_check_branch
          %284 = sbr.rel (%p282) target = $region48
        $region47: #{tpu_custom_call.1} parent=43 // pred_region
          %s285 = sand.u32 %s113, 1
          %s286 = scalar_lea.sflag [#allocation4], %s285
          %s287 = sand.u32 %s113, 1
          %s288 = smul.addr %s287, 4
          %s289 = scalar_lea.vmem [#allocation5], %s288
          %291 = dma.done %s286, 64
        $region48: #{tpu_custom_call.1} parent=43 // pred_fallthru
          _
      $region44: #{tpu_custom_call.1} parent=5 // pred_fallthru
        _
    $region6: #{tpu_custom_call.1} parent=1 // loop_footer
      %s19 = sadd.s32 1, %s15
    $region7: #{tpu_custom_call.1} parent=1 // loop_footer_branch
      %14 = sbr.rel target = $region3
    $region8: #{tpu_custom_call.1} parent=1 // loop_exit
      _
    %292 = vsyncpa [#allocation3], 1
    %s293 = scalar_lea.sflag [#allocation3], 1
    %294 = vsyncpa %s293, 1
    %295 = vsyncpa [#allocation4], 1
    %s296 = scalar_lea.sflag [#allocation4], 1
    %297 = vsyncpa %s296, 1

</llo_original>
